<compile_context>
chip_gen: v7x
topology: tpu7x:2x2x1
jax: 0.10.0
libtpu: 0.0.40
codegen_flags: <defaults>
</compile_context>

<pallas_src>
import jax
import jax.numpy as jnp
from jax.experimental import pallas as pl
from jax.experimental.pallas import tpu as pltpu

BN_EPS = 1e-5


def _head_kernel(feat_ref, wb_ref, bb_ref, scale_ref, shift_ref, wc_ref, bc_ref,
                 bott_ref, logits_ref):
    """Bottleneck Linear + (eval) BatchNorm + ReLU + classifier Linear for one batch tile."""
    feat = feat_ref[...].astype(jnp.bfloat16)                       # [tm, F] bf16 for MXU
    h = jnp.dot(feat, wb_ref[...], preferred_element_type=jnp.float32) + bb_ref[...]
    h = jnp.maximum(h * scale_ref[...] + shift_ref[...], 0.0)       # folded BN + ReLU (f32)
    bott_ref[...] = h
    logits_ref[...] = (
        jnp.dot(h.astype(jnp.bfloat16), wc_ref[...], preferred_element_type=jnp.float32)
        + bc_ref[...]
    )


def _bottleneck_kernel(feat_ref, wb_ref, bb_ref, scale_ref, shift_ref, bott_ref):
    """total_classes=None path: bottleneck Linear + (eval) BatchNorm + ReLU only."""
    feat = feat_ref[...].astype(jnp.bfloat16)
    h = jnp.dot(feat, wb_ref[...], preferred_element_type=jnp.float32) + bb_ref[...]
    bott_ref[...] = jnp.maximum(h * scale_ref[...] + shift_ref[...], 0.0)


def _round_up(x, m):
    return (x + m - 1) // m * m


def init_params(key, feature_len, bn_dim=256, total_classes=None):
    """Matches the PyTorch __init__: bottleneck W ~ N(0, 0.005), b = 0.1;
    classifier W ~ N(0, 0.01), b = 0; BatchNorm1d at default init.
    Weights stored as [in, out] (transpose of torch's [out, in]) in bf16."""
    k1, k2 = jax.random.split(key, 2)
    params = {
        "wb": (0.005 * jax.random.normal(k1, (feature_len, bn_dim),
                                         dtype=jnp.float32)).astype(jnp.bfloat16),
        "bb": jnp.full((1, bn_dim), 0.1, dtype=jnp.float32),
        "bn_gamma": jnp.ones((bn_dim,), jnp.float32),
        "bn_beta": jnp.zeros((bn_dim,), jnp.float32),
        "bn_mean": jnp.zeros((bn_dim,), jnp.float32),
        "bn_var": jnp.ones((bn_dim,), jnp.float32),
        "wc": None,
        "bc": None,
    }
    if total_classes:
        params["wc"] = (0.01 * jax.random.normal(k2, (bn_dim, total_classes),
                                                 dtype=jnp.float32)).astype(jnp.bfloat16)
        params["bc"] = jnp.zeros((1, total_classes), jnp.float32)
    return params


def backbone_forward(features, params, tm=128):
    """features: [B, feature_len] -> (out_bottleneck [B, bn_dim], logits [B, C] or None)."""
    B, F = features.shape
    wb, bb = params["wb"], params["bb"]
    BN = wb.shape[1]

    # Fold eval-mode BatchNorm into a per-feature affine: y = h * scale + shift.
    scale1 = params["bn_gamma"] / jnp.sqrt(params["bn_var"] + BN_EPS)
    shift1 = params["bn_beta"] - params["bn_mean"] * scale1
    scale = scale1.reshape(1, BN).astype(jnp.float32)
    shift = shift1.reshape(1, BN).astype(jnp.float32)

    # Batch tiling: pick the tile, pad B up to a multiple of it.
    tm = min(tm, _round_up(B, 8))
    B_pad = _round_up(B, tm)
    feat = features.astype(jnp.float32)
    if B_pad != B:
        feat = jnp.pad(feat, ((0, B_pad - B), (0, 0)))
    grid = (B_pad // tm,)

    act_spec = pl.BlockSpec((tm, F), lambda i: (i, 0))

    def const_spec(shape):
        return pl.BlockSpec(shape, lambda i: (0, 0))

    cparams = pltpu.CompilerParams(
        dimension_semantics=("parallel",),
        vmem_limit_bytes=32 * 1024 * 1024,
    )

    if params["wc"] is None:
        bott = pl.pallas_call(
            _bottleneck_kernel,
            out_shape=jax.ShapeDtypeStruct((B_pad, BN), jnp.float32),
            grid=grid,
            in_specs=[act_spec, const_spec((F, BN)), const_spec((1, BN)),
                      const_spec((1, BN)), const_spec((1, BN))],
            out_specs=pl.BlockSpec((tm, BN), lambda i: (i, 0)),
            compiler_params=cparams,
        )(feat, wb, bb, scale, shift)
        return bott[:B], None

    wc, bc = params["wc"], params["bc"]
    C = wc.shape[1]
    C_pad = _round_up(C, 128)                         # lane-dense classifier output
    wc_p = jnp.zeros((BN, C_pad), wc.dtype).at[:, :C].set(wc)
    bc_p = jnp.zeros((1, C_pad), jnp.float32).at[:, :C].set(bc)

    bott, logits = pl.pallas_call(
        _head_kernel,
        out_shape=(jax.ShapeDtypeStruct((B_pad, BN), jnp.float32),
                   jax.ShapeDtypeStruct((B_pad, C_pad), jnp.float32)),
        grid=grid,
        in_specs=[act_spec, const_spec((F, BN)), const_spec((1, BN)),
                  const_spec((1, BN)), const_spec((1, BN)),
                  const_spec((BN, C_pad)), const_spec((1, C_pad))],
        out_specs=(pl.BlockSpec((tm, BN), lambda i: (i, 0)),
                   pl.BlockSpec((tm, C_pad), lambda i: (i, 0))),
        compiler_params=cparams,
    )(feat, wb, bb, scale, shift, wc_p, bc_p)
    return bott[:B], logits[:B, :C]


def _reference_forward(features, params):
    """Pure-JAX reference mirroring the kernel's precision policy (bf16 matmuls, f32 acc)."""
    scale = params["bn_gamma"] / jnp.sqrt(params["bn_var"] + BN_EPS)
    shift = params["bn_beta"] - params["bn_mean"] * scale
    h = jnp.dot(features.astype(jnp.bfloat16), params["wb"],
                preferred_element_type=jnp.float32) + params["bb"]
    h = jnp.maximum(h * scale[None, :] + shift[None, :], 0.0)
    if params["wc"] is None:
        return h, None
    logits = jnp.dot(h.astype(jnp.bfloat16), params["wc"],
                     preferred_element_type=jnp.float32) + params["bc"]
    return h, logits


if __name__ == "__main__":
    feature_len = 512        # resnet final feature width (e.g. resnet18/34)
    bn_dim = 256
    total_classes = 10
    batch = 8

    key = jax.random.PRNGKey(0)
    kx, kp = jax.random.split(key)
    features = jax.random.normal(kx, (batch, feature_len), dtype=jnp.float32)
    params = init_params(kp, feature_len, bn_dim, total_classes)

    # total_classes path: (out_bottleneck, logits)
    out_bottleneck, logits = backbone_forward(features, params)
    out_bottleneck, logits = jax.block_until_ready((out_bottleneck, logits))

    ref_b, ref_l = _reference_forward(features, params)
    assert out_bottleneck.shape == (batch, bn_dim)
    assert logits.shape == (batch, total_classes)
    assert jnp.allclose(out_bottleneck, ref_b, rtol=1e-4, atol=1e-4)
    assert jnp.allclose(logits, ref_l, rtol=1e-4, atol=1e-4)

    # total_classes=None path: (out_bottleneck, None)
    params_nc = dict(params, wc=None, bc=None)
    b_only, none_logits = backbone_forward(features, params_nc)
    b_only = jax.block_until_ready(b_only)
    assert none_logits is None
    assert jnp.allclose(b_only, ref_b, rtol=1e-4, atol=1e-4)

    print("KERNEL_OK")
</pallas_src>

<mosaic_0001>
module attributes {stable_mosaic.version = 11 : i64} {
  func.func @_head_kernel(%arg0: i32, %arg1: memref<8x512xf32, #tpu.memory_space<vmem>>, %arg2: memref<512x256xbf16, #tpu.memory_space<vmem>>, %arg3: memref<1x256xf32, #tpu.memory_space<vmem>>, %arg4: memref<1x256xf32, #tpu.memory_space<vmem>>, %arg5: memref<1x256xf32, #tpu.memory_space<vmem>>, %arg6: memref<256x128xbf16, #tpu.memory_space<vmem>>, %arg7: memref<1x128xf32, #tpu.memory_space<vmem>>, %arg8: memref<8x256xf32, #tpu.memory_space<vmem>>, %arg9: memref<8x128xf32, #tpu.memory_space<vmem>>) attributes {dimension_semantics = [#tpu.dimension_semantics<parallel>], iteration_bounds = array<i64: 1>, scalar_prefetch = 0 : i64, scratch_operands = 0 : i64, tpu.core_type = #tpu.core_type<tc>, window_params = [{transform_indices = @transform_0, window_bounds = array<i64: 8, 512>}, {pipeline_mode = #tpu.pipeline_mode<synchronous>, transform_indices = @transform_1, window_bounds = array<i64: 512, 256>}, {pipeline_mode = #tpu.pipeline_mode<synchronous>, transform_indices = @transform_2, window_bounds = array<i64: 1, 256>}, {pipeline_mode = #tpu.pipeline_mode<synchronous>, transform_indices = @transform_3, window_bounds = array<i64: 1, 256>}, {pipeline_mode = #tpu.pipeline_mode<synchronous>, transform_indices = @transform_4, window_bounds = array<i64: 1, 256>}, {pipeline_mode = #tpu.pipeline_mode<synchronous>, transform_indices = @transform_5, window_bounds = array<i64: 256, 128>}, {pipeline_mode = #tpu.pipeline_mode<synchronous>, transform_indices = @transform_6, window_bounds = array<i64: 1, 128>}, {transform_indices = @transform_7, window_bounds = array<i64: 8, 256>}, {transform_indices = @transform_8, window_bounds = array<i64: 8, 128>}]} {
    %c0 = arith.constant 0 : index
    %c0_0 = arith.constant 0 : index
    %0 = vector.load %arg1[%c0, %c0_0] : memref<8x512xf32, #tpu.memory_space<vmem>>, vector<8x512xf32>
    %1 = arith.truncf %0 : vector<8x512xf32> to vector<8x512xbf16>
    %c0_1 = arith.constant 0 : index
    %c0_2 = arith.constant 0 : index
    %2 = vector.load %arg2[%c0_1, %c0_2] : memref<512x256xbf16, #tpu.memory_space<vmem>>, vector<512x256xbf16>
    %cst = arith.constant dense<0.000000e+00> : vector<8x256xf32>
    %3 = tpu.matmul %1, %2, %cst {dimension_numbers = #tpu.dot_dimension_numbers<[1], [0], [0], [1], [0, 0, 1, 1], [], []>} : vector<8x512xbf16>, vector<512x256xbf16>, vector<8x256xf32> -> vector<8x256xf32>
    %c0_3 = arith.constant 0 : index
    %c0_4 = arith.constant 0 : index
    %4 = vector.load %arg3[%c0_3, %c0_4] : memref<1x256xf32, #tpu.memory_space<vmem>>, vector<1x256xf32>
    %5 = vector.broadcast %4 : vector<1x256xf32> to vector<8x256xf32>
    %6 = arith.addf %3, %5 : vector<8x256xf32>
    %c0_5 = arith.constant 0 : index
    %c0_6 = arith.constant 0 : index
    %7 = vector.load %arg4[%c0_5, %c0_6] : memref<1x256xf32, #tpu.memory_space<vmem>>, vector<1x256xf32>
    %8 = vector.broadcast %7 : vector<1x256xf32> to vector<8x256xf32>
    %9 = arith.mulf %6, %8 : vector<8x256xf32>
    %c0_7 = arith.constant 0 : index
    %c0_8 = arith.constant 0 : index
    %10 = vector.load %arg5[%c0_7, %c0_8] : memref<1x256xf32, #tpu.memory_space<vmem>>, vector<1x256xf32>
    %11 = vector.broadcast %10 : vector<1x256xf32> to vector<8x256xf32>
    %12 = arith.addf %9, %11 : vector<8x256xf32>
    %cst_9 = arith.constant 0.000000e+00 : f32
    %13 = vector.broadcast %cst_9 : f32 to vector<8x256xf32>
    %14 = arith.maximumf %12, %13 : vector<8x256xf32>
    %c0_10 = arith.constant 0 : index
    %c0_11 = arith.constant 0 : index
    %15 = vector.load %arg8[%c0_10, %c0_11] : memref<8x256xf32, #tpu.memory_space<vmem>>, vector<8x256xf32>
    tpu.vector_store %arg8[%c0_10, %c0_11], %14 {strides = array<i32>} : memref<8x256xf32, #tpu.memory_space<vmem>>, vector<8x256xf32>,
    %16 = arith.truncf %14 : vector<8x256xf32> to vector<8x256xbf16>
    %c0_12 = arith.constant 0 : index
    %c0_13 = arith.constant 0 : index
    %17 = vector.load %arg6[%c0_12, %c0_13] : memref<256x128xbf16, #tpu.memory_space<vmem>>, vector<256x128xbf16>
    %cst_14 = arith.constant dense<0.000000e+00> : vector<8x128xf32>
    %18 = tpu.matmul %16, %17, %cst_14 {dimension_numbers = #tpu.dot_dimension_numbers<[1], [0], [0], [1], [0, 0, 1, 1], [], []>} : vector<8x256xbf16>, vector<256x128xbf16>, vector<8x128xf32> -> vector<8x128xf32>
    %c0_15 = arith.constant 0 : index
    %c0_16 = arith.constant 0 : index
    %19 = vector.load %arg7[%c0_15, %c0_16] : memref<1x128xf32, #tpu.memory_space<vmem>>, vector<1x128xf32>
    %20 = vector.broadcast %19 : vector<1x128xf32> to vector<8x128xf32>
    %21 = arith.addf %18, %20 : vector<8x128xf32>
    %c0_17 = arith.constant 0 : index
    %c0_18 = arith.constant 0 : index
    %22 = vector.load %arg9[%c0_17, %c0_18] : memref<8x128xf32, #tpu.memory_space<vmem>>, vector<8x128xf32>
    tpu.vector_store %arg9[%c0_17, %c0_18], %21 {strides = array<i32>} : memref<8x128xf32, #tpu.memory_space<vmem>>, vector<8x128xf32>,
    return
  }
  func.func @transform_0(%arg0: i32) -> (i32, i32) {
    %c0_i32 = arith.constant 0 : i32
    %c0_i32_0 = arith.constant 0 : i32
    return %arg0, %c0_i32 : i32, i32
  }
  func.func @transform_1(%arg0: i32) -> (i32, i32) {
    %c0_i32 = arith.constant 0 : i32
    %c0_i32_0 = arith.constant 0 : i32
    %c0_i32_1 = arith.constant 0 : i32
    return %c0_i32, %c0_i32_0 : i32, i32
  }
  func.func @transform_2(%arg0: i32) -> (i32, i32) {
    %c0_i32 = arith.constant 0 : i32
    %c0_i32_0 = arith.constant 0 : i32
    %c0_i32_1 = arith.constant 0 : i32
    return %c0_i32, %c0_i32_0 : i32, i32
  }
  func.func @transform_3(%arg0: i32) -> (i32, i32) {
    %c0_i32 = arith.constant 0 : i32
    %c0_i32_0 = arith.constant 0 : i32
    %c0_i32_1 = arith.constant 0 : i32
    return %c0_i32, %c0_i32_0 : i32, i32
  }
  func.func @transform_4(%arg0: i32) -> (i32, i32) {
    %c0_i32 = arith.constant 0 : i32
    %c0_i32_0 = arith.constant 0 : i32
    %c0_i32_1 = arith.constant 0 : i32
    return %c0_i32, %c0_i32_0 : i32, i32
  }
  func.func @transform_5(%arg0: i32) -> (i32, i32) {
    %c0_i32 = arith.constant 0 : i32
    %c0_i32_0 = arith.constant 0 : i32
    %c0_i32_1 = arith.constant 0 : i32
    return %c0_i32, %c0_i32_0 : i32, i32
  }
  func.func @transform_6(%arg0: i32) -> (i32, i32) {
    %c0_i32 = arith.constant 0 : i32
    %c0_i32_0 = arith.constant 0 : i32
    %c0_i32_1 = arith.constant 0 : i32
    return %c0_i32, %c0_i32_0 : i32, i32
  }
  func.func @transform_7(%arg0: i32) -> (i32, i32) {
    %c0_i32 = arith.constant 0 : i32
    %c0_i32_0 = arith.constant 0 : i32
    return %arg0, %c0_i32 : i32, i32
  }
  func.func @transform_8(%arg0: i32) -> (i32, i32) {
    %c0_i32 = arith.constant 0 : i32
    %c0_i32_0 = arith.constant 0 : i32
    return %arg0, %c0_i32 : i32, i32
  }
}

</mosaic_0001>

<llo_original>
// kernel: tpu_custom_call.1
$region0: #{tpu_custom_call.1}
  #allocation0 [shape = 'u32[]', space=smem, size = 0x4, offset = 0x4, fixed_abs, tag = 'smem constant byte address 0x4 - core index']
  #allocation1 [shape = 'u32[144,128]{1,0:T(1,128)}', space=vmem, size = 0x12000, scoped, tag = 'internal scratch']
  %s0 = inlined_call_operand.hbm [shape: f32[8,512], index: 0, kind: input, shape index: {}]
  %s1 = inlined_call_operand.hbm [shape: bf16[512,256], index: 1, kind: input, shape index: {}]
  %s2 = inlined_call_operand.vmem [shape: f32[1,256], index: 2, kind: input, shape index: {}]
  %s3 = inlined_call_operand.vmem [shape: f32[1,256], index: 3, kind: input, shape index: {}]
  %s4 = inlined_call_operand.vmem [shape: f32[1,256], index: 4, kind: input, shape index: {}]
  %s5 = inlined_call_operand.hbm [shape: bf16[256,128], index: 5, kind: input, shape index: {}]
  %s6 = inlined_call_operand.vmem [shape: f32[1,128], index: 6, kind: input, shape index: {}]
  %s7 = inlined_call_operand.hbm [shape: f32[8,256], index: 7, kind: output, shape index: {0}]
  %s8 = inlined_call_operand.hbm [shape: f32[8,128], index: 8, kind: output, shape index: {1}]
  %9 = xla_tuple %s7, %s8
  %s10 = sld [smem:[#allocation0]]
  $region58: #{tpu_custom_call.1} parent=0
    _
  %s12 = ssub.s32 1, %s10
  %s13 = scalar_select 0, %s12, %s10
  $region1: #{tpu_custom_call.1} parent=0
    #allocation2 [shape = 'u8[16384]{0}', space=vmem, size = 0x4000, scoped, tag = 'input window, operand 0, single buffered']
    #allocation3 [shape = 's32[1]{0}', space=sflag, size = 0x4, scoped, tag = 'scoped memory for tpu_custom_call.1']
    #allocation4 [shape = 's32[1]{0}', space=sflag, size = 0x4, scoped, tag = 'scoped memory for tpu_custom_call.1']
    #allocation5 [shape = 'u8[262144]{0}', space=vmem, size = 0x40000, scoped, tag = 'input window, operand 1, single buffered']
    #allocation6 [shape = 's32[1]{0}', space=sflag, size = 0x4, scoped, tag = 'scoped memory for tpu_custom_call.1']
    #allocation7 [shape = 'u8[65536]{0}', space=vmem, size = 0x10000, scoped, tag = 'input window, operand 5, single buffered']
    #allocation8 [shape = 'u8[8192]{0}', space=vmem, size = 0x2000, scoped, tag = 'output window, operand 0, single buffered']
    #allocation9 [shape = 'u8[4096]{0}', space=vmem, size = 0x1000, scoped, tag = 'output window, operand 1, single buffered']
    #allocation10 [shape = 's32[1]{0}', space=sflag, size = 0x4, scoped, tag = 'scoped memory for tpu_custom_call.1']
    %14 = vsyncpa [#allocation3], 0
    %15 = vsyncpa [#allocation6], 0
    %16 = vsyncpa [#allocation4], 0
    %17 = vsyncpa [#allocation10], 0
    // Predicated region
    $region2: #{tpu_custom_call.1} parent=1 // pred_check
      _
    $region3: #{tpu_custom_call.1} parent=1 // pred_check_branch
      %19 = sbr.rel (0) target = $region5
    $region4: #{tpu_custom_call.1} parent=1 // pred_region
      %s21 = ssub.s32 512, 512
      %22 = vsyncadd [#allocation3], %s21
      %s24 = sshll.u32 [#allocation2], 4
      %s25 = int_to_ptr.vmem [resolvable:$true] %s24
      %27 = dma.hbm_to_vmem [thread:$0]  %s0, 512, %s25, [#allocation3]
    $region5: #{tpu_custom_call.1} parent=1 // pred_fallthru
      _
    // Predicated region
    $region6: #{tpu_custom_call.1} parent=1 // pred_check
      _
    $region7: #{tpu_custom_call.1} parent=1 // pred_check_branch
      %29 = sbr.rel (0) target = $region9
    $region8: #{tpu_custom_call.1} parent=1 // pred_region
      %s31 = ssub.s32 8192, 8192
      %32 = vsyncadd [#allocation6], %s31
      %s33 = sshll.u32 [#allocation5], 4
      %s34 = int_to_ptr.vmem [resolvable:$true] %s33
      %39 = dma.hbm_to_vmem [thread:$0]  %s1, 8192, %s34, [#allocation6], 128, 128, 8
    $region9: #{tpu_custom_call.1} parent=1 // pred_fallthru
      _
    // Predicated region
    $region10: #{tpu_custom_call.1} parent=1 // pred_check
      _
    $region11: #{tpu_custom_call.1} parent=1 // pred_check_branch
      %41 = sbr.rel (0) target = $region13
    $region12: #{tpu_custom_call.1} parent=1 // pred_region
      _
    $region13: #{tpu_custom_call.1} parent=1 // pred_fallthru
      _
    // Predicated region
    $region14: #{tpu_custom_call.1} parent=1 // pred_check
      _
    $region15: #{tpu_custom_call.1} parent=1 // pred_check_branch
      %43 = sbr.rel (0) target = $region17
    $region16: #{tpu_custom_call.1} parent=1 // pred_region
      _
    $region17: #{tpu_custom_call.1} parent=1 // pred_fallthru
      _
    // Predicated region
    $region18: #{tpu_custom_call.1} parent=1 // pred_check
      _
    $region19: #{tpu_custom_call.1} parent=1 // pred_check_branch
      %45 = sbr.rel (0) target = $region21
    $region20: #{tpu_custom_call.1} parent=1 // pred_region
      _
    $region21: #{tpu_custom_call.1} parent=1 // pred_fallthru
      _
    // Predicated region
    $region22: #{tpu_custom_call.1} parent=1 // pred_check
      _
    $region23: #{tpu_custom_call.1} parent=1 // pred_check_branch
      %47 = sbr.rel (0) target = $region25
    $region24: #{tpu_custom_call.1} parent=1 // pred_region
      %s49 = ssub.s32 2048, 2048
      %50 = vsyncadd [#allocation6], %s49
      %s51 = sshll.u32 [#allocation7], 4
      %s52 = int_to_ptr.vmem [resolvable:$true] %s51
      %57 = dma.hbm_to_vmem [thread:$0]  %s5, 2048, %s52, [#allocation6], 64, 64, 4
    $region25: #{tpu_custom_call.1} parent=1 // pred_fallthru
      _
    // Predicated region
    $region26: #{tpu_custom_call.1} parent=1 // pred_check
      _
    $region27: #{tpu_custom_call.1} parent=1 // pred_check_branch
      %59 = sbr.rel (0) target = $region29
    $region28: #{tpu_custom_call.1} parent=1 // pred_region
      _
    $region29: #{tpu_custom_call.1} parent=1 // pred_fallthru
      _
    // Predicated region
    $region30: #{tpu_custom_call.1} parent=1 // pred_check
      _
    $region31: #{tpu_custom_call.1} parent=1 // pred_check_branch
      %61 = sbr.rel (0) target = $region33
    $region32: #{tpu_custom_call.1} parent=1 // pred_region
      %62 = dma.done [#allocation3], 512
    $region33: #{tpu_custom_call.1} parent=1 // pred_fallthru
      _
    // Predicated region
    $region34: #{tpu_custom_call.1} parent=1 // pred_check
      _
    $region35: #{tpu_custom_call.1} parent=1 // pred_check_branch
      %64 = sbr.rel (0) target = $region37
    $region36: #{tpu_custom_call.1} parent=1 // pred_region
      %65 = dma.done [#allocation6], 8192
    $region37: #{tpu_custom_call.1} parent=1 // pred_fallthru
      _
    // Predicated region
    $region38: #{tpu_custom_call.1} parent=1 // pred_check
      _
    $region39: #{tpu_custom_call.1} parent=1 // pred_check_branch
      %67 = sbr.rel (0) target = $region41
    $region40: #{tpu_custom_call.1} parent=1 // pred_region
      %68 = dma.done [#allocation6], 2048
    $region41: #{tpu_custom_call.1} parent=1 // pred_fallthru
      _
    %v70 = vld [vmem:[#allocation2] sm:$0xff]
    %v71 = vld [vmem:[#allocation2 + $0x8] sm:$0xff]
    %v72 = vld [vmem:[#allocation2 + $0x10] sm:$0xff]
    %v73 = vld [vmem:[#allocation2 + $0x18] sm:$0xff]
    %v74 = vpack.c.bf16 %v70, %v70
    %v75 = vpack.c.bf16 %v71, %v71
    %v76 = vpack.c.bf16 %v72, %v72
    %v77 = vpack.c.bf16 %v73, %v73
    %v78 = vld [vmem:[#allocation5] sm:$0xff]
    %v79 = vld [vmem:[#allocation5 + $0x8] sm:$0xff]
    %v80 = vld [vmem:[#allocation5 + $0x10] sm:$0xff]
    %v81 = vld [vmem:[#allocation5 + $0x18] sm:$0xff]
    %v82 = vld [vmem:[#allocation5 + $0x20] sm:$0xff]
    %v83 = vld [vmem:[#allocation5 + $0x28] sm:$0xff]
    %v84 = vld [vmem:[#allocation5 + $0x30] sm:$0xff]
    %v85 = vld [vmem:[#allocation5 + $0x38] sm:$0xff]
    %v86 = vld [vmem:[#allocation5 + $0x40] sm:$0xff]
    %v87 = vld [vmem:[#allocation5 + $0x48] sm:$0xff]
    %v88 = vld [vmem:[#allocation5 + $0x50] sm:$0xff]
    %v89 = vld [vmem:[#allocation5 + $0x58] sm:$0xff]
    %v90 = vld [vmem:[#allocation5 + $0x60] sm:$0xff]
    %v91 = vld [vmem:[#allocation5 + $0x68] sm:$0xff]
    %v92 = vld [vmem:[#allocation5 + $0x70] sm:$0xff]
    %v93 = vld [vmem:[#allocation5 + $0x78] sm:$0xff]
    %v94 = vld [vmem:[#allocation5 + $0x80] sm:$0xff]
    %v95 = vld [vmem:[#allocation5 + $0x88] sm:$0xff]
    %v96 = vld [vmem:[#allocation5 + $0x90] sm:$0xff]
    %v97 = vld [vmem:[#allocation5 + $0x98] sm:$0xff]
    %v98 = vld [vmem:[#allocation5 + $0xa0] sm:$0xff]
    %v99 = vld [vmem:[#allocation5 + $0xa8] sm:$0xff]
    %v100 = vld [vmem:[#allocation5 + $0xb0] sm:$0xff]
    %v101 = vld [vmem:[#allocation5 + $0xb8] sm:$0xff]
    %v102 = vld [vmem:[#allocation5 + $0xc0] sm:$0xff]
    %v103 = vld [vmem:[#allocation5 + $0xc8] sm:$0xff]
    %v104 = vld [vmem:[#allocation5 + $0xd0] sm:$0xff]
    %v105 = vld [vmem:[#allocation5 + $0xd8] sm:$0xff]
    %v106 = vld [vmem:[#allocation5 + $0xe0] sm:$0xff]
    %v107 = vld [vmem:[#allocation5 + $0xe8] sm:$0xff]
    %v108 = vld [vmem:[#allocation5 + $0xf0] sm:$0xff]
    %v109 = vld [vmem:[#allocation5 + $0xf8] sm:$0xff]
    %v110 = vld [vmem:[#allocation5 + $0x100] sm:$0xff]
    %v111 = vld [vmem:[#allocation5 + $0x108] sm:$0xff]
    %v112 = vld [vmem:[#allocation5 + $0x110] sm:$0xff]
    %v113 = vld [vmem:[#allocation5 + $0x118] sm:$0xff]
    %v114 = vld [vmem:[#allocation5 + $0x120] sm:$0xff]
    %v115 = vld [vmem:[#allocation5 + $0x128] sm:$0xff]
    %v116 = vld [vmem:[#allocation5 + $0x130] sm:$0xff]
    %v117 = vld [vmem:[#allocation5 + $0x138] sm:$0xff]
    %v118 = vld [vmem:[#allocation5 + $0x140] sm:$0xff]
    %v119 = vld [vmem:[#allocation5 + $0x148] sm:$0xff]
    %v120 = vld [vmem:[#allocation5 + $0x150] sm:$0xff]
    %v121 = vld [vmem:[#allocation5 + $0x158] sm:$0xff]
    %v122 = vld [vmem:[#allocation5 + $0x160] sm:$0xff]
    %v123 = vld [vmem:[#allocation5 + $0x168] sm:$0xff]
    %v124 = vld [vmem:[#allocation5 + $0x170] sm:$0xff]
    %v125 = vld [vmem:[#allocation5 + $0x178] sm:$0xff]
    %v126 = vld [vmem:[#allocation5 + $0x180] sm:$0xff]
    %v127 = vld [vmem:[#allocation5 + $0x188] sm:$0xff]
    %v128 = vld [vmem:[#allocation5 + $0x190] sm:$0xff]
    %v129 = vld [vmem:[#allocation5 + $0x198] sm:$0xff]
    %v130 = vld [vmem:[#allocation5 + $0x1a0] sm:$0xff]
    %v131 = vld [vmem:[#allocation5 + $0x1a8] sm:$0xff]
    %v132 = vld [vmem:[#allocation5 + $0x1b0] sm:$0xff]
    %v133 = vld [vmem:[#allocation5 + $0x1b8] sm:$0xff]
    %v134 = vld [vmem:[#allocation5 + $0x1c0] sm:$0xff]
    %v135 = vld [vmem:[#allocation5 + $0x1c8] sm:$0xff]
    %v136 = vld [vmem:[#allocation5 + $0x1d0] sm:$0xff]
    %v137 = vld [vmem:[#allocation5 + $0x1d8] sm:$0xff]
    %v138 = vld [vmem:[#allocation5 + $0x1e0] sm:$0xff]
    %v139 = vld [vmem:[#allocation5 + $0x1e8] sm:$0xff]
    %v140 = vld [vmem:[#allocation5 + $0x1f0] sm:$0xff]
    %v141 = vld [vmem:[#allocation5 + $0x1f8] sm:$0xff]
    %v142 = vld [vmem:[%s2] sm:$0x3]
    %v144 = vlaneseq
    %v145 = vshrl.u32 %v144, 7
    %v146 = vsub.s32 0, %v145
    %v147 = vrot.slane %v142, %v146
    %v148 = vlaneseq
    %v149 = vshrl.u32 %v148, 7
    %v150 = vsub.s32 1, %v149
    %v151 = vrot.slane %v142, %v150
    %v218 = vunpack.c.l.b16 %v78
    %v219 = vunpack.c.h.b16 %v78
    %v220 = vunpack.c.l.b16 %v79
    %v221 = vunpack.c.h.b16 %v79
    %v222 = vunpack.c.l.b16 %v80
    %v223 = vunpack.c.h.b16 %v80
    %v224 = vunpack.c.l.b16 %v81
    %v225 = vunpack.c.h.b16 %v81
    %v226 = vunpack.c.l.b16 %v82
    %v227 = vunpack.c.h.b16 %v82
    %v228 = vunpack.c.l.b16 %v83
    %v229 = vunpack.c.h.b16 %v83
    %v230 = vunpack.c.l.b16 %v84
    %v231 = vunpack.c.h.b16 %v84
    %v232 = vunpack.c.l.b16 %v85
    %v233 = vunpack.c.h.b16 %v85
    %v234 = vunpack.c.l.b16 %v86
    %v235 = vunpack.c.h.b16 %v86
    %v236 = vunpack.c.l.b16 %v87
    %v237 = vunpack.c.h.b16 %v87
    %v238 = vunpack.c.l.b16 %v88
    %v239 = vunpack.c.h.b16 %v88
    %v240 = vunpack.c.l.b16 %v89
    %v241 = vunpack.c.h.b16 %v89
    %v242 = vunpack.c.l.b16 %v90
    %v243 = vunpack.c.h.b16 %v90
    %v244 = vunpack.c.l.b16 %v91
    %v245 = vunpack.c.h.b16 %v91
    %v246 = vunpack.c.l.b16 %v92
    %v247 = vunpack.c.h.b16 %v92
    %v248 = vunpack.c.l.b16 %v93
    %v249 = vunpack.c.h.b16 %v93
    %v250 = vunpack.c.l.b16 %v94
    %v251 = vunpack.c.h.b16 %v94
    %v252 = vunpack.c.l.b16 %v95
    %v253 = vunpack.c.h.b16 %v95
    %v254 = vunpack.c.l.b16 %v96
    %v255 = vunpack.c.h.b16 %v96
    %v256 = vunpack.c.l.b16 %v97
    %v257 = vunpack.c.h.b16 %v97
    %v258 = vunpack.c.l.b16 %v98
    %v259 = vunpack.c.h.b16 %v98
    %v260 = vunpack.c.l.b16 %v99
    %v261 = vunpack.c.h.b16 %v99
    %v262 = vunpack.c.l.b16 %v100
    %v263 = vunpack.c.h.b16 %v100
    %v264 = vunpack.c.l.b16 %v101
    %v265 = vunpack.c.h.b16 %v101
    %v266 = vunpack.c.l.b16 %v102
    %v267 = vunpack.c.h.b16 %v102
    %v268 = vunpack.c.l.b16 %v103
    %v269 = vunpack.c.h.b16 %v103
    %v270 = vunpack.c.l.b16 %v104
    %v271 = vunpack.c.h.b16 %v104
    %v272 = vunpack.c.l.b16 %v105
    %v273 = vunpack.c.h.b16 %v105
    %v274 = vunpack.c.l.b16 %v106
    %v275 = vunpack.c.h.b16 %v106
    %v276 = vunpack.c.l.b16 %v107
    %v277 = vunpack.c.h.b16 %v107
    %v278 = vunpack.c.l.b16 %v108
    %v279 = vunpack.c.h.b16 %v108
    %v280 = vunpack.c.l.b16 %v109
    %v281 = vunpack.c.h.b16 %v109
    %v282 = vunpack.c.l.b16 %v110
    %v283 = vunpack.c.h.b16 %v110
    %v284 = vunpack.c.l.b16 %v111
    %v285 = vunpack.c.h.b16 %v111
    %v286 = vunpack.c.l.b16 %v112
    %v287 = vunpack.c.h.b16 %v112
    %v288 = vunpack.c.l.b16 %v113
    %v289 = vunpack.c.h.b16 %v113
    %v290 = vunpack.c.l.b16 %v114
    %v291 = vunpack.c.h.b16 %v114
    %v292 = vunpack.c.l.b16 %v115
    %v293 = vunpack.c.h.b16 %v115
    %v294 = vunpack.c.l.b16 %v116
    %v295 = vunpack.c.h.b16 %v116
    %v296 = vunpack.c.l.b16 %v117
    %v297 = vunpack.c.h.b16 %v117
    %v298 = vunpack.c.l.b16 %v118
    %v299 = vunpack.c.h.b16 %v118
    %v300 = vunpack.c.l.b16 %v119
    %v301 = vunpack.c.h.b16 %v119
    %v302 = vunpack.c.l.b16 %v120
    %v303 = vunpack.c.h.b16 %v120
    %v304 = vunpack.c.l.b16 %v121
    %v305 = vunpack.c.h.b16 %v121
    %v306 = vunpack.c.l.b16 %v122
    %v307 = vunpack.c.h.b16 %v122
    %v308 = vunpack.c.l.b16 %v123
    %v309 = vunpack.c.h.b16 %v123
    %v310 = vunpack.c.l.b16 %v124
    %v311 = vunpack.c.h.b16 %v124
    %v312 = vunpack.c.l.b16 %v125
    %v313 = vunpack.c.h.b16 %v125
    %v314 = vunpack.c.l.b16 %v126
    %v315 = vunpack.c.h.b16 %v126
    %v316 = vunpack.c.l.b16 %v127
    %v317 = vunpack.c.h.b16 %v127
    %v318 = vunpack.c.l.b16 %v128
    %v319 = vunpack.c.h.b16 %v128
    %v320 = vunpack.c.l.b16 %v129
    %v321 = vunpack.c.h.b16 %v129
    %v322 = vunpack.c.l.b16 %v130
    %v323 = vunpack.c.h.b16 %v130
    %v324 = vunpack.c.l.b16 %v131
    %v325 = vunpack.c.h.b16 %v131
    %v326 = vunpack.c.l.b16 %v132
    %v327 = vunpack.c.h.b16 %v132
    %v328 = vunpack.c.l.b16 %v133
    %v329 = vunpack.c.h.b16 %v133
    %v330 = vunpack.c.l.b16 %v134
    %v331 = vunpack.c.h.b16 %v134
    %v332 = vunpack.c.l.b16 %v135
    %v333 = vunpack.c.h.b16 %v135
    %v334 = vunpack.c.l.b16 %v136
    %v335 = vunpack.c.h.b16 %v136
    %v336 = vunpack.c.l.b16 %v137
    %v337 = vunpack.c.h.b16 %v137
    %v338 = vunpack.c.l.b16 %v138
    %v339 = vunpack.c.h.b16 %v138
    %v340 = vunpack.c.l.b16 %v139
    %v341 = vunpack.c.h.b16 %v139
    %v342 = vunpack.c.l.b16 %v140
    %v343 = vunpack.c.h.b16 %v140
    %v344 = vunpack.c.l.b16 %v141
    %v345 = vunpack.c.h.b16 %v141
    %v346 = vpack.c.b16 %v220, %v218
    %v347 = vpack.c.b16 %v221, %v219
    %v348 = vpack.c.b16 %v224, %v222
    %v349 = vpack.c.b16 %v225, %v223
    %v350 = vpack.c.b16 %v228, %v226
    %v351 = vpack.c.b16 %v229, %v227
    %v352 = vpack.c.b16 %v232, %v230
    %v353 = vpack.c.b16 %v233, %v231
    %v354 = vpack.c.b16 %v236, %v234
    %v355 = vpack.c.b16 %v237, %v235
    %v356 = vpack.c.b16 %v240, %v238
    %v357 = vpack.c.b16 %v241, %v239
    %v358 = vpack.c.b16 %v244, %v242
    %v359 = vpack.c.b16 %v245, %v243
    %v360 = vpack.c.b16 %v248, %v246
    %v361 = vpack.c.b16 %v249, %v247
    %v362 = vpack.c.b16 %v252, %v250
    %v363 = vpack.c.b16 %v253, %v251
    %v364 = vpack.c.b16 %v256, %v254
    %v365 = vpack.c.b16 %v257, %v255
    %v366 = vpack.c.b16 %v260, %v258
    %v367 = vpack.c.b16 %v261, %v259
    %v368 = vpack.c.b16 %v264, %v262
    %v369 = vpack.c.b16 %v265, %v263
    %v370 = vpack.c.b16 %v268, %v266
    %v371 = vpack.c.b16 %v269, %v267
    %v372 = vpack.c.b16 %v272, %v270
    %v373 = vpack.c.b16 %v273, %v271
    %v374 = vpack.c.b16 %v276, %v274
    %v375 = vpack.c.b16 %v277, %v275
    %v376 = vpack.c.b16 %v280, %v278
    %v377 = vpack.c.b16 %v281, %v279
    %v378 = vpack.c.b16 %v284, %v282
    %v379 = vpack.c.b16 %v285, %v283
    %v380 = vpack.c.b16 %v288, %v286
    %v381 = vpack.c.b16 %v289, %v287
    %v382 = vpack.c.b16 %v292, %v290
    %v383 = vpack.c.b16 %v293, %v291
    %v384 = vpack.c.b16 %v296, %v294
    %v385 = vpack.c.b16 %v297, %v295
    %v386 = vpack.c.b16 %v300, %v298
    %v387 = vpack.c.b16 %v301, %v299
    %v388 = vpack.c.b16 %v304, %v302
    %v389 = vpack.c.b16 %v305, %v303
    %v390 = vpack.c.b16 %v308, %v306
    %v391 = vpack.c.b16 %v309, %v307
    %v392 = vpack.c.b16 %v312, %v310
    %v393 = vpack.c.b16 %v313, %v311
    %v394 = vpack.c.b16 %v316, %v314
    %v395 = vpack.c.b16 %v317, %v315
    %v396 = vpack.c.b16 %v320, %v318
    %v397 = vpack.c.b16 %v321, %v319
    %v398 = vpack.c.b16 %v324, %v322
    %v399 = vpack.c.b16 %v325, %v323
    %v400 = vpack.c.b16 %v328, %v326
    %v401 = vpack.c.b16 %v329, %v327
    %v402 = vpack.c.b16 %v332, %v330
    %v403 = vpack.c.b16 %v333, %v331
    %v404 = vpack.c.b16 %v336, %v334
    %v405 = vpack.c.b16 %v337, %v335
    %v406 = vpack.c.b16 %v340, %v338
    %v407 = vpack.c.b16 %v341, %v339
    %v408 = vpack.c.b16 %v344, %v342
    %v409 = vpack.c.b16 %v345, %v343
    %474 = vmatprep.subr.bf16.mxu0 %v347
    %475 = vmatpush1.bf16.msra.mxu0 %v346
    %476 = vmatprep.subr.bf16.mxu0 %v349
    %477 = vmatpush1.bf16.msra.mxu0 %v348
    %478 = vmatprep.subr.bf16.mxu0 %v351
    %479 = vmatpush1.bf16.msra.mxu0 %v350
    %480 = vmatprep.subr.bf16.mxu0 %v353
    %481 = vmatpush1.bf16.msra.mxu0 %v352
    %482 = vmatprep.subr.bf16.mxu0 %v355
    %483 = vmatpush1.bf16.msra.mxu0 %v354
    %484 = vmatprep.subr.bf16.mxu0 %v357
    %485 = vmatpush1.bf16.msra.mxu0 %v356
    %486 = vmatprep.subr.bf16.mxu0 %v359
    %487 = vmatpush1.bf16.msra.mxu0 %v358
    %488 = vmatprep.subr.bf16.mxu0 %v361
    %489 = vmatpush1.bf16.msra.mxu0 %v360
    %490 = vmatprep.subr.bf16.mxu0 %v363
    %491 = vmatpush1.bf16.msra.mxu0 %v362
    %492 = vmatprep.subr.bf16.mxu0 %v365
    %493 = vmatpush1.bf16.msra.mxu0 %v364
    %494 = vmatprep.subr.bf16.mxu0 %v367
    %495 = vmatpush1.bf16.msra.mxu0 %v366
    %496 = vmatprep.subr.bf16.mxu0 %v369
    %497 = vmatpush1.bf16.msra.mxu0 %v368
    %498 = vmatprep.subr.bf16.mxu0 %v371
    %499 = vmatpush1.bf16.msra.mxu0 %v370
    %500 = vmatprep.subr.bf16.mxu0 %v373
    %501 = vmatpush1.bf16.msra.mxu0 %v372
    %502 = vmatprep.subr.bf16.mxu0 %v375
    %503 = vmatpush1.bf16.msra.mxu0 %v374
    %504 = vmatprep.subr.bf16.mxu0 %v377
    %505 = vmatpush1.bf16.msra.mxu0 %v376
    %506 = vmatprep.mubr.bf16.mxu0 %v75
    %507 = vmatmul.mubr.bf16.gmra.mrb[0].mxu0 %v74
    %v508 = vpop.f32.mrb[0].mxu0
    %v509 = vadd.f32 %v147, %v508
    %v510 = vpop.f32.mrb[0].mxu0
    %v511 = vadd.f32 %v151, %v510
    %v512 = vpop.f32.mrb[0].mxu0
    %v513 = vpop.f32.mrb[0].mxu0
    %514 = vdwg.mxu0
    %515 = vmatprep.subr.bf16.mxu0 %v379
    %516 = vmatpush1.bf16.msra.mxu0 %v378
    %517 = vmatprep.subr.bf16.mxu0 %v381
    %518 = vmatpush1.bf16.msra.mxu0 %v380
    %519 = vmatprep.subr.bf16.mxu0 %v383
    %520 = vmatpush1.bf16.msra.mxu0 %v382
    %521 = vmatprep.subr.bf16.mxu0 %v385
    %522 = vmatpush1.bf16.msra.mxu0 %v384
    %523 = vmatprep.subr.bf16.mxu0 %v387
    %524 = vmatpush1.bf16.msra.mxu0 %v386
    %525 = vmatprep.subr.bf16.mxu0 %v389
    %526 = vmatpush1.bf16.msra.mxu0 %v388
    %527 = vmatprep.subr.bf16.mxu0 %v391
    %528 = vmatpush1.bf16.msra.mxu0 %v390
    %529 = vmatprep.subr.bf16.mxu0 %v393
    %530 = vmatpush1.bf16.msra.mxu0 %v392
    %531 = vmatprep.subr.bf16.mxu0 %v395
    %532 = vmatpush1.bf16.msra.mxu0 %v394
    %533 = vmatprep.subr.bf16.mxu0 %v397
    %534 = vmatpush1.bf16.msra.mxu0 %v396
    %535 = vmatprep.subr.bf16.mxu0 %v399
    %536 = vmatpush1.bf16.msra.mxu0 %v398
    %537 = vmatprep.subr.bf16.mxu0 %v401
    %538 = vmatpush1.bf16.msra.mxu0 %v400
    %539 = vmatprep.subr.bf16.mxu0 %v403
    %540 = vmatpush1.bf16.msra.mxu0 %v402
    %541 = vmatprep.subr.bf16.mxu0 %v405
    %542 = vmatpush1.bf16.msra.mxu0 %v404
    %543 = vmatprep.subr.bf16.mxu0 %v407
    %544 = vmatpush1.bf16.msra.mxu0 %v406
    %545 = vmatprep.subr.bf16.mxu0 %v409
    %546 = vmatpush1.bf16.msra.mxu0 %v408
    %547 = vmatprep.mubr.bf16.mxu0 %v77
    %548 = vmatmul.mubr.bf16.gmra.mrb[0].mxu0 %v76
    %v549 = vpop.f32.mrb[0].mxu0
    %v550 = vadd.f32 %v509, %v549
    %v551 = vpop.f32.mrb[0].mxu0
    %v552 = vadd.f32 %v511, %v551
    %v553 = vpop.f32.mrb[0].mxu0
    %v554 = vpop.f32.mrb[0].mxu0
    %555 = vdwg.mxu0
    %v556 = vld [vmem:[%s3] sm:$0x3]
    %v558 = vlaneseq
    %v559 = vshrl.u32 %v558, 7
    %v560 = vsub.s32 0, %v559
    %v561 = vrot.slane %v556, %v560
    %v562 = vlaneseq
    %v563 = vshrl.u32 %v562, 7
    %v564 = vsub.s32 1, %v563
    %v565 = vrot.slane %v556, %v564
    %v568 = vmul.f32 %v550, %v561
    %v569 = vmul.f32 %v552, %v565
    %v570 = vld [vmem:[%s4] sm:$0x3]
    %v572 = vlaneseq
    %v573 = vshrl.u32 %v572, 7
    %v574 = vsub.s32 0, %v573
    %v575 = vrot.slane %v570, %v574
    %v576 = vlaneseq
    %v577 = vshrl.u32 %v576, 7
    %v578 = vsub.s32 1, %v577
    %v579 = vrot.slane %v570, %v578
    %v582 = vadd.f32 %v568, %v575
    %v583 = vadd.f32 %v569, %v579
    %v584 = vmax.f32 %v582, 0.0
    %v585 = vmax.f32 %v583, 0.0
    %586 = vst [vmem:[#allocation8] sm:$0xff] %v584
    %587 = vst [vmem:[#allocation8 + $0x8] sm:$0xff] %v585
    %v588 = vpack.c.bf16 %v584, %v584
    %v589 = vpack.c.bf16 %v585, %v585
    %v590 = vld [vmem:[#allocation7] sm:$0xf]
    %v591 = vld [vmem:[#allocation7 + $0x4] sm:$0xf]
    %v592 = vld [vmem:[#allocation7 + $0x8] sm:$0xf]
    %v593 = vld [vmem:[#allocation7 + $0xc] sm:$0xf]
    %v594 = vld [vmem:[#allocation7 + $0x10] sm:$0xf]
    %v595 = vld [vmem:[#allocation7 + $0x14] sm:$0xf]
    %v596 = vld [vmem:[#allocation7 + $0x18] sm:$0xf]
    %v597 = vld [vmem:[#allocation7 + $0x1c] sm:$0xf]
    %v598 = vld [vmem:[#allocation7 + $0x20] sm:$0xf]
    %v599 = vld [vmem:[#allocation7 + $0x24] sm:$0xf]
    %v600 = vld [vmem:[#allocation7 + $0x28] sm:$0xf]
    %v601 = vld [vmem:[#allocation7 + $0x2c] sm:$0xf]
    %v602 = vld [vmem:[#allocation7 + $0x30] sm:$0xf]
    %v603 = vld [vmem:[#allocation7 + $0x34] sm:$0xf]
    %v604 = vld [vmem:[#allocation7 + $0x38] sm:$0xf]
    %v605 = vld [vmem:[#allocation7 + $0x3c] sm:$0xf]
    %v606 = vld [vmem:[#allocation7 + $0x40] sm:$0xf]
    %v607 = vld [vmem:[#allocation7 + $0x44] sm:$0xf]
    %v608 = vld [vmem:[#allocation7 + $0x48] sm:$0xf]
    %v609 = vld [vmem:[#allocation7 + $0x4c] sm:$0xf]
    %v610 = vld [vmem:[#allocation7 + $0x50] sm:$0xf]
    %v611 = vld [vmem:[#allocation7 + $0x54] sm:$0xf]
    %v612 = vld [vmem:[#allocation7 + $0x58] sm:$0xf]
    %v613 = vld [vmem:[#allocation7 + $0x5c] sm:$0xf]
    %v614 = vld [vmem:[#allocation7 + $0x60] sm:$0xf]
    %v615 = vld [vmem:[#allocation7 + $0x64] sm:$0xf]
    %v616 = vld [vmem:[#allocation7 + $0x68] sm:$0xf]
    %v617 = vld [vmem:[#allocation7 + $0x6c] sm:$0xf]
    %v618 = vld [vmem:[#allocation7 + $0x70] sm:$0xf]
    %v619 = vld [vmem:[#allocation7 + $0x74] sm:$0xf]
    %v620 = vld [vmem:[#allocation7 + $0x78] sm:$0xf]
    %v621 = vld [vmem:[#allocation7 + $0x7c] sm:$0xf]
    %v622 = vld [vmem:[%s6] sm:$0x1]
    %v624 = vlaneseq
    %v625 = vshrl.u32 %v624, 7
    %v626 = vsub.s32 0, %v625
    %v627 = vrot.slane %v622, %v626
    %v661 = vunpack.c.l.b16 %v590
    %v662 = vunpack.c.l.b16 %v591
    %v663 = vunpack.c.l.b16 %v592
    %v664 = vunpack.c.l.b16 %v593
    %v665 = vunpack.c.l.b16 %v594
    %v666 = vunpack.c.l.b16 %v595
    %v667 = vunpack.c.l.b16 %v596
    %v668 = vunpack.c.l.b16 %v597
    %v669 = vunpack.c.l.b16 %v598
    %v670 = vunpack.c.l.b16 %v599
    %v671 = vunpack.c.l.b16 %v600
    %v672 = vunpack.c.l.b16 %v601
    %v673 = vunpack.c.l.b16 %v602
    %v674 = vunpack.c.l.b16 %v603
    %v675 = vunpack.c.l.b16 %v604
    %v676 = vunpack.c.l.b16 %v605
    %v677 = vunpack.c.l.b16 %v606
    %v678 = vunpack.c.l.b16 %v607
    %v679 = vunpack.c.l.b16 %v608
    %v680 = vunpack.c.l.b16 %v609
    %v681 = vunpack.c.l.b16 %v610
    %v682 = vunpack.c.l.b16 %v611
    %v683 = vunpack.c.l.b16 %v612
    %v684 = vunpack.c.l.b16 %v613
    %v685 = vunpack.c.l.b16 %v614
    %v686 = vunpack.c.l.b16 %v615
    %v687 = vunpack.c.l.b16 %v616
    %v688 = vunpack.c.l.b16 %v617
    %v689 = vunpack.c.l.b16 %v618
    %v690 = vunpack.c.l.b16 %v619
    %v691 = vunpack.c.l.b16 %v620
    %v692 = vunpack.c.l.b16 %v621
    %v693 = vpack.c.b16 %v662, %v661
    %v694 = vpack.c.b16 %v664, %v663
    %v695 = vpack.c.b16 %v666, %v665
    %v696 = vpack.c.b16 %v668, %v667
    %v697 = vpack.c.b16 %v670, %v669
    %v698 = vpack.c.b16 %v672, %v671
    %v699 = vpack.c.b16 %v674, %v673
    %v700 = vpack.c.b16 %v676, %v675
    %v701 = vpack.c.b16 %v678, %v677
    %v702 = vpack.c.b16 %v680, %v679
    %v703 = vpack.c.b16 %v682, %v681
    %v704 = vpack.c.b16 %v684, %v683
    %v705 = vpack.c.b16 %v686, %v685
    %v706 = vpack.c.b16 %v688, %v687
    %v707 = vpack.c.b16 %v690, %v689
    %v708 = vpack.c.b16 %v692, %v691
    %725 = vmatprep.subr.bf16.mxu0 0
    %726 = vmatpush1.bf16.msra.mxu0 %v693
    %727 = vmatprep.subr.bf16.mxu0 0
    %728 = vmatpush1.bf16.msra.mxu0 %v694
    %729 = vmatprep.subr.bf16.mxu0 0
    %730 = vmatpush1.bf16.msra.mxu0 %v695
    %731 = vmatprep.subr.bf16.mxu0 0
    %732 = vmatpush1.bf16.msra.mxu0 %v696
    %733 = vmatprep.subr.bf16.mxu0 0
    %734 = vmatpush1.bf16.msra.mxu0 %v697
    %735 = vmatprep.subr.bf16.mxu0 0
    %736 = vmatpush1.bf16.msra.mxu0 %v698
    %737 = vmatprep.subr.bf16.mxu0 0
    %738 = vmatpush1.bf16.msra.mxu0 %v699
    %739 = vmatprep.subr.bf16.mxu0 0
    %740 = vmatpush1.bf16.msra.mxu0 %v700
    %741 = vmatprep.subr.bf16.mxu0 0
    %742 = vmatpush1.bf16.msra.mxu0 %v701
    %743 = vmatprep.subr.bf16.mxu0 0
    %744 = vmatpush1.bf16.msra.mxu0 %v702
    %745 = vmatprep.subr.bf16.mxu0 0
    %746 = vmatpush1.bf16.msra.mxu0 %v703
    %747 = vmatprep.subr.bf16.mxu0 0
    %748 = vmatpush1.bf16.msra.mxu0 %v704
    %749 = vmatprep.subr.bf16.mxu0 0
    %750 = vmatpush1.bf16.msra.mxu0 %v705
    %751 = vmatprep.subr.bf16.mxu0 0
    %752 = vmatpush1.bf16.msra.mxu0 %v706
    %753 = vmatprep.subr.bf16.mxu0 0
    %754 = vmatpush1.bf16.msra.mxu0 %v707
    %755 = vmatprep.subr.bf16.mxu0 0
    %756 = vmatpush1.bf16.msra.mxu0 %v708
    %757 = vmatprep.mubr.bf16.mxu0 %v589
    %758 = vmatmul.mubr.bf16.gmra.mrb[0].mxu0 %v588
    %v759 = vpop.f32.mrb[0].mxu0
    %v760 = vadd.f32 %v627, %v759
    %v761 = vpop.f32.mrb[0].mxu0
    %v762 = vpop.f32.mrb[0].mxu0
    %v763 = vpop.f32.mrb[0].mxu0
    %764 = vdwg.mxu0
    %765 = vst [vmem:[#allocation9] sm:$0xff] %v760
    // Predicated region
    $region42: #{tpu_custom_call.1} parent=1 // pred_check
      _
    $region43: #{tpu_custom_call.1} parent=1 // pred_check_branch
      %767 = sbr.rel (0) target = $region45
    $region44: #{tpu_custom_call.1} parent=1 // pred_region
      %s769 = ssub.s32 256, 256
      %770 = vsyncadd [#allocation4], %s769
      %s772 = sshll.u32 [#allocation8], 4
      %s773 = int_to_ptr.vmem [resolvable:$true] %s772
      %775 = dma.vmem_to_hbm [thread:$0]  %s773, 256, %s7, [#allocation4]
    $region45: #{tpu_custom_call.1} parent=1 // pred_fallthru
      _
    // Predicated region
    $region46: #{tpu_custom_call.1} parent=1 // pred_check
      _
    $region47: #{tpu_custom_call.1} parent=1 // pred_check_branch
      %777 = sbr.rel (0) target = $region49
    $region48: #{tpu_custom_call.1} parent=1 // pred_region
      %s779 = ssub.s32 128, 128
      %780 = vsyncadd [#allocation10], %s779
      %s782 = sshll.u32 [#allocation9], 4
      %s783 = int_to_ptr.vmem [resolvable:$true] %s782
      %785 = dma.vmem_to_hbm [thread:$0]  %s783, 128, %s8, [#allocation10]
    $region49: #{tpu_custom_call.1} parent=1 // pred_fallthru
      _
    // Predicated region
    $region50: #{tpu_custom_call.1} parent=1 // pred_check
      _
    $region51: #{tpu_custom_call.1} parent=1 // pred_check_branch
      %787 = sbr.rel (0) target = $region53
    $region52: #{tpu_custom_call.1} parent=1 // pred_region
      %788 = dma.done [#allocation4], 256
    $region53: #{tpu_custom_call.1} parent=1 // pred_fallthru
      _
    // Predicated region
    $region54: #{tpu_custom_call.1} parent=1 // pred_check
      _
    $region55: #{tpu_custom_call.1} parent=1 // pred_check_branch
      %790 = sbr.rel (0) target = $region57
    $region56: #{tpu_custom_call.1} parent=1 // pred_region
      %791 = dma.done [#allocation10], 128
    $region57: #{tpu_custom_call.1} parent=1 // pred_fallthru
      _
    %792 = vsyncpa [#allocation3], 1
    %793 = vsyncpa [#allocation6], 1
    %794 = vsyncpa [#allocation4], 1
    %795 = vsyncpa [#allocation10], 1

</llo_original>
